<compile_context>
chip_gen: v6e
topology: v6e:2x2x1
jax: 0.10.0
libtpu: 0.0.40
codegen_flags: <defaults>
</compile_context>

<pallas_src>
import functools

import jax
import jax.numpy as jnp
from jax.experimental import pallas as pl
from jax.experimental.pallas import tpu as pltpu


def _round_up(x, m):
    return (x + m - 1) // m * m


def policy_kernel(x_ref, p1_ref, p2_ref, p3_ref, out_ref, *, sd_pad, action_dim):
    x = x_ref[...]                                        # (tb, sd_pad) f32

    # ---- fused layer 1: [actor_h | critic_g] = relu(x @ W1 + b1) ----
    w1 = p1_ref[0:sd_pad, :]                              # (sd_pad, 512)
    b1 = p1_ref[sd_pad:sd_pad + 1, :].astype(jnp.float32)
    hg = jnp.dot(x.astype(w1.dtype), w1, preferred_element_type=jnp.float32) + b1
    hg = jnp.maximum(hg, 0.0)                             # (tb, 512) f32

    # ---- fused layer 2 (block-diagonal weights) ----
    w2 = p2_ref[0:512, :]                                 # (512, 256)
    b2 = p2_ref[512:513, :].astype(jnp.float32)
    hg2 = jnp.dot(hg.astype(w2.dtype), w2, preferred_element_type=jnp.float32) + b2
    hg2 = jnp.maximum(hg2, 0.0)                           # (tb, 256) f32

    # ---- fused layer 3: lanes [0:A) = actor logits, lane A = critic value ----
    w3 = p3_ref[0:256, :]                                 # (256, 128)
    b3 = p3_ref[256:257, :].astype(jnp.float32)
    z = jnp.dot(hg2.astype(w3.dtype), w3, preferred_element_type=jnp.float32) + b3  # (tb,128)

    # masked, numerically-stable softmax over the action lanes only
    lane = jax.lax.broadcasted_iota(jnp.int32, z.shape, 1)
    is_logit = lane < action_dim
    logits = jnp.where(is_logit, z, -jnp.inf)
    m = jnp.max(logits, axis=-1, keepdims=True)
    e = jnp.where(is_logit, jnp.exp(logits - m), 0.0)
    denom = jnp.sum(e, axis=-1, keepdims=True)
    probs = e * pl.reciprocal(denom, approx=False)

    # lane-dense output: probs | value (lane A) | zeros
    out_ref[...] = jnp.where(lane == action_dim, z, probs).astype(out_ref.dtype)


def pack_params(params, state_dim, action_dim, param_dtype=jnp.bfloat16):
    """Fuse actor+critic per layer; pack each layer's weight + one bias row."""
    sd_pad = _round_up(state_dim, 8)

    w1 = jnp.concatenate([params["aw1"], params["cw1"]], axis=1)      # (sd, 512)
    w1 = jnp.pad(w1, ((0, sd_pad - state_dim), (0, 0)))
    b1 = jnp.concatenate([params["ab1"], params["cb1"]], axis=1)      # (1, 512)
    p1 = jnp.concatenate([w1, b1], axis=0).astype(param_dtype)        # (sd_pad+1, 512)

    w2 = jnp.zeros((512, 256), jnp.float32)
    w2 = w2.at[0:256, 0:128].set(params["aw2"])
    w2 = w2.at[256:512, 128:256].set(params["cw2"])
    b2 = jnp.concatenate([params["ab2"], params["cb2"]], axis=1)      # (1, 256)
    p2 = jnp.concatenate([w2, b2], axis=0).astype(param_dtype)        # (513, 256)

    w3 = jnp.zeros((256, 128), jnp.float32)
    w3 = w3.at[0:128, 0:action_dim].set(params["aw3"])
    w3 = w3.at[128:256, action_dim:action_dim + 1].set(params["cw3"])
    b3 = jnp.zeros((1, 128), jnp.float32)
    b3 = b3.at[:, 0:action_dim].set(params["ab3"])
    b3 = b3.at[:, action_dim:action_dim + 1].set(params["cb3"])
    p3 = jnp.concatenate([w3, b3], axis=0).astype(param_dtype)        # (257, 128)

    return p1, p2, p3


def policy_network_forward(x, params, *, param_dtype=jnp.bfloat16, batch_tile=256):
    """x: (B, state_dim) float32. Returns (probs (B, A), value (B, 1))."""
    B, state_dim = x.shape
    action_dim = params["aw3"].shape[1]
    assert action_dim + 1 <= 128, "fused output assumes action_dim + 1 <= 128"
    assert batch_tile % 8 == 0

    sd_pad = _round_up(state_dim, 8)
    p1, p2, p3 = pack_params(params, state_dim, action_dim, param_dtype)

    tb = min(_round_up(B, 8), batch_tile)     # batch tile (multiple of 8)
    b_pad = _round_up(B, tb)
    x_p = x.astype(jnp.float32)
    if (b_pad, sd_pad) != (B, state_dim):
        x_p = jnp.pad(x_p, ((0, b_pad - B), (0, sd_pad - state_dim)))

    kernel = functools.partial(policy_kernel, sd_pad=sd_pad, action_dim=action_dim)

    out = pl.pallas_call(
        kernel,
        out_shape=jax.ShapeDtypeStruct((b_pad, 128), jnp.float32),
        grid=(b_pad // tb,),
        in_specs=[
            pl.BlockSpec((tb, sd_pad), lambda i: (i, 0)),   # x: tiled over batch
            pl.BlockSpec(p1.shape, lambda i: (0, 0)),       # params stay resident
            pl.BlockSpec(p2.shape, lambda i: (0, 0)),
            pl.BlockSpec(p3.shape, lambda i: (0, 0)),
        ],
        out_specs=pl.BlockSpec((tb, 128), lambda i: (i, 0)),
        compiler_params=pltpu.CompilerParams(
            dimension_semantics=("parallel",)),
    )(x_p, p1, p2, p3)

    probs = out[:B, :action_dim]
    value = out[:B, action_dim:action_dim + 1]
    return probs, value


def init_params(key, state_dim, action_dim):
    """Deterministic synthetic parameters (Kaiming-ish uniform like torch.nn.Linear)."""
    def linear(k, fan_in, fan_out):
        kw, kb = jax.random.split(k)
        bound = 1.0 / jnp.sqrt(fan_in)
        # stored pre-transposed: (in, out)
        w = jax.random.uniform(kw, (fan_in, fan_out), jnp.float32, -bound, bound)
        b = jax.random.uniform(kb, (1, fan_out), jnp.float32, -bound, bound)
        return w, b

    keys = jax.random.split(key, 6)
    aw1, ab1 = linear(keys[0], state_dim, 256)
    aw2, ab2 = linear(keys[1], 256, 128)
    aw3, ab3 = linear(keys[2], 128, action_dim)
    cw1, cb1 = linear(keys[3], state_dim, 256)
    cw2, cb2 = linear(keys[4], 256, 128)
    cw3, cb3 = linear(keys[5], 128, 1)
    return dict(
        aw1=aw1, ab1=ab1, aw2=aw2, ab2=ab2, aw3=aw3, ab3=ab3,
        cw1=cw1, cb1=cb1, cw2=cw2, cb2=cb2, cw3=cw3, cb3=cb3,
    )


def reference_forward(x, p):
    """Pure-JAX reference mirroring the PyTorch module semantics (f32)."""
    h = jnp.maximum(x @ p["aw1"] + p["ab1"], 0.0)
    h = jnp.maximum(h @ p["aw2"] + p["ab2"], 0.0)
    logits = h @ p["aw3"] + p["ab3"]
    probs = jax.nn.softmax(logits, axis=-1)
    g = jnp.maximum(x @ p["cw1"] + p["cb1"], 0.0)
    g = jnp.maximum(g @ p["cw2"] + p["cb2"], 0.0)
    value = g @ p["cw3"] + p["cb3"]
    return probs, value


if __name__ == "__main__":
    B, state_dim, action_dim = 8, 32, 8

    key = jax.random.PRNGKey(0)
    kx, kp = jax.random.split(key)
    x = jax.random.normal(kx, (B, state_dim), jnp.float32)
    params = init_params(kp, state_dim, action_dim)

    # default path: bf16 MXU operands (per perf feedback), f32 elementwise/accumulate
    probs, value = jax.block_until_ready(policy_network_forward(x, params))

    probs_ref, value_ref = reference_forward(x, params)
    assert probs.shape == (B, action_dim) and value.shape == (B, 1)
    assert jnp.allclose(probs, probs_ref, atol=2e-2, rtol=2e-2)
    assert jnp.allclose(value, value_ref, atol=5e-2, rtol=5e-2)
    assert jnp.allclose(jnp.sum(probs, axis=-1), 1.0, atol=1e-5)

    # exact-semantics check: same kernel with f32-stored parameters
    probs32, value32 = jax.block_until_ready(
        policy_network_forward(x, params, param_dtype=jnp.float32))
    assert jnp.allclose(probs32, probs_ref, atol=1e-5, rtol=1e-5)
    assert jnp.allclose(value32, value_ref, atol=1e-5, rtol=1e-5)
    assert jnp.allclose(jnp.sum(probs32, axis=-1), 1.0, atol=1e-5)

    print("KERNEL_OK")
</pallas_src>

<mosaic_0001>
module attributes {stable_mosaic.version = 11 : i64} {
  func.func @policy_kernel(%arg0: i32, %arg1: memref<8x32xf32, #tpu.memory_space<vmem>>, %arg2: memref<33x512xbf16, #tpu.memory_space<vmem>>, %arg3: memref<513x256xbf16, #tpu.memory_space<vmem>>, %arg4: memref<257x128xbf16, #tpu.memory_space<vmem>>, %arg5: memref<8x128xf32, #tpu.memory_space<vmem>>) attributes {dimension_semantics = [#tpu.dimension_semantics<parallel>], iteration_bounds = array<i64: 1>, scalar_prefetch = 0 : i64, scratch_operands = 0 : i64, tpu.core_type = #tpu.core_type<tc>, window_params = [{transform_indices = @transform_0, window_bounds = array<i64: 8, 32>}, {pipeline_mode = #tpu.pipeline_mode<synchronous>, transform_indices = @transform_1, window_bounds = array<i64: 33, 512>}, {pipeline_mode = #tpu.pipeline_mode<synchronous>, transform_indices = @transform_2, window_bounds = array<i64: 513, 256>}, {pipeline_mode = #tpu.pipeline_mode<synchronous>, transform_indices = @transform_3, window_bounds = array<i64: 257, 128>}, {transform_indices = @transform_4, window_bounds = array<i64: 8, 128>}]} {
    %c0 = arith.constant 0 : index
    %c0_0 = arith.constant 0 : index
    %0 = vector.load %arg1[%c0, %c0_0] : memref<8x32xf32, #tpu.memory_space<vmem>>, vector<8x32xf32>
    %c0_1 = arith.constant 0 : index
    %c0_2 = arith.constant 0 : index
    %1 = vector.load %arg2[%c0_1, %c0_2] : memref<33x512xbf16, #tpu.memory_space<vmem>>, vector<32x512xbf16>
    %c32 = arith.constant 32 : index
    %c0_3 = arith.constant 0 : index
    %2 = vector.load %arg2[%c32, %c0_3] : memref<33x512xbf16, #tpu.memory_space<vmem>>, vector<1x512xbf16>
    %3 = arith.extf %2 : vector<1x512xbf16> to vector<1x512xf32>
    %4 = arith.truncf %0 : vector<8x32xf32> to vector<8x32xbf16>
    %cst = arith.constant dense<0.000000e+00> : vector<8x512xf32>
    %5 = tpu.matmul %4, %1, %cst {dimension_numbers = #tpu.dot_dimension_numbers<[1], [0], [0], [1], [0, 0, 1, 1], [], []>} : vector<8x32xbf16>, vector<32x512xbf16>, vector<8x512xf32> -> vector<8x512xf32>
    %6 = vector.broadcast %3 : vector<1x512xf32> to vector<8x512xf32>
    %7 = arith.addf %5, %6 : vector<8x512xf32>
    %cst_4 = arith.constant 0.000000e+00 : f32
    %8 = vector.broadcast %cst_4 : f32 to vector<8x512xf32>
    %9 = arith.maximumf %7, %8 : vector<8x512xf32>
    %c0_5 = arith.constant 0 : index
    %c0_6 = arith.constant 0 : index
    %10 = vector.load %arg3[%c0_5, %c0_6] : memref<513x256xbf16, #tpu.memory_space<vmem>>, vector<512x256xbf16>
    %c512 = arith.constant 512 : index
    %c0_7 = arith.constant 0 : index
    %11 = vector.load %arg3[%c512, %c0_7] : memref<513x256xbf16, #tpu.memory_space<vmem>>, vector<1x256xbf16>
    %12 = arith.extf %11 : vector<1x256xbf16> to vector<1x256xf32>
    %13 = arith.truncf %9 : vector<8x512xf32> to vector<8x512xbf16>
    %cst_8 = arith.constant dense<0.000000e+00> : vector<8x256xf32>
    %14 = tpu.matmul %13, %10, %cst_8 {dimension_numbers = #tpu.dot_dimension_numbers<[1], [0], [0], [1], [0, 0, 1, 1], [], []>} : vector<8x512xbf16>, vector<512x256xbf16>, vector<8x256xf32> -> vector<8x256xf32>
    %15 = vector.broadcast %12 : vector<1x256xf32> to vector<8x256xf32>
    %16 = arith.addf %14, %15 : vector<8x256xf32>
    %cst_9 = arith.constant 0.000000e+00 : f32
    %17 = vector.broadcast %cst_9 : f32 to vector<8x256xf32>
    %18 = arith.maximumf %16, %17 : vector<8x256xf32>
    %c0_10 = arith.constant 0 : index
    %c0_11 = arith.constant 0 : index
    %19 = vector.load %arg4[%c0_10, %c0_11] : memref<257x128xbf16, #tpu.memory_space<vmem>>, vector<256x128xbf16>
    %c256 = arith.constant 256 : index
    %c0_12 = arith.constant 0 : index
    %20 = vector.load %arg4[%c256, %c0_12] : memref<257x128xbf16, #tpu.memory_space<vmem>>, vector<1x128xbf16>
    %21 = arith.extf %20 : vector<1x128xbf16> to vector<1x128xf32>
    %22 = arith.truncf %18 : vector<8x256xf32> to vector<8x256xbf16>
    %cst_13 = arith.constant dense<0.000000e+00> : vector<8x128xf32>
    %23 = tpu.matmul %22, %19, %cst_13 {dimension_numbers = #tpu.dot_dimension_numbers<[1], [0], [0], [1], [0, 0, 1, 1], [], []>} : vector<8x256xbf16>, vector<256x128xbf16>, vector<8x128xf32> -> vector<8x128xf32>
    %24 = vector.broadcast %21 : vector<1x128xf32> to vector<8x128xf32>
    %25 = arith.addf %23, %24 : vector<8x128xf32>
    %26 = tpu.iota {dimensions = array<i32: 1>} : vector<8x128xi32>
    %c8_i32 = arith.constant 8 : i32
    %27 = vector.broadcast %c8_i32 : i32 to vector<8x128xi32>
    %28 = arith.cmpi slt, %26, %27 : vector<8x128xi32>
    %cst_14 = arith.constant 0xFF800000 : f32
    %29 = vector.broadcast %cst_14 : f32 to vector<8x128xf32>
    %30 = arith.select %28, %25, %29 : vector<8x128xi1>, vector<8x128xf32>
    %cst_15 = arith.constant dense<0xFF800000> : vector<8xf32>
    %31 = vector.multi_reduction <maximumf>, %30, %cst_15 [1] : vector<8x128xf32> to vector<8xf32>
    %32 = vector.shape_cast %31 : vector<8xf32> to vector<8x1xf32>
    %33 = vector.broadcast %32 : vector<8x1xf32> to vector<8x128xf32>
    %34 = arith.subf %30, %33 : vector<8x128xf32>
    %35 = math.exp %34 : vector<8x128xf32>
    %cst_16 = arith.constant 0.000000e+00 : f32
    %36 = vector.broadcast %cst_16 : f32 to vector<8x128xf32>
    %37 = arith.select %28, %35, %36 : vector<8x128xi1>, vector<8x128xf32>
    %cst_17 = arith.constant dense<0.000000e+00> : vector<8xf32>
    %38 = vector.multi_reduction <add>, %37, %cst_17 [1] : vector<8x128xf32> to vector<8xf32>
    %39 = vector.shape_cast %38 : vector<8xf32> to vector<8x1xf32>
    %40 = tpu.reciprocal %39 : vector<8x1xf32> -> vector<8x1xf32>
    %41 = vector.broadcast %40 : vector<8x1xf32> to vector<8x128xf32>
    %42 = arith.mulf %37, %41 : vector<8x128xf32>
    %c8_i32_18 = arith.constant 8 : i32
    %43 = vector.broadcast %c8_i32_18 : i32 to vector<8x128xi32>
    %44 = arith.cmpi eq, %26, %43 : vector<8x128xi32>
    %45 = arith.select %44, %25, %42 : vector<8x128xi1>, vector<8x128xf32>
    %c0_19 = arith.constant 0 : index
    %c0_20 = arith.constant 0 : index
    %46 = vector.load %arg5[%c0_19, %c0_20] : memref<8x128xf32, #tpu.memory_space<vmem>>, vector<8x128xf32>
    tpu.vector_store %arg5[%c0_19, %c0_20], %45 {strides = array<i32>} : memref<8x128xf32, #tpu.memory_space<vmem>>, vector<8x128xf32>,
    return
  }
  func.func @transform_0(%arg0: i32) -> (i32, i32) {
    %c0_i32 = arith.constant 0 : i32
    %c0_i32_0 = arith.constant 0 : i32
    return %arg0, %c0_i32 : i32, i32
  }
  func.func @transform_1(%arg0: i32) -> (i32, i32) {
    %c0_i32 = arith.constant 0 : i32
    %c0_i32_0 = arith.constant 0 : i32
    %c0_i32_1 = arith.constant 0 : i32
    return %c0_i32, %c0_i32_0 : i32, i32
  }
  func.func @transform_2(%arg0: i32) -> (i32, i32) {
    %c0_i32 = arith.constant 0 : i32
    %c0_i32_0 = arith.constant 0 : i32
    %c0_i32_1 = arith.constant 0 : i32
    return %c0_i32, %c0_i32_0 : i32, i32
  }
  func.func @transform_3(%arg0: i32) -> (i32, i32) {
    %c0_i32 = arith.constant 0 : i32
    %c0_i32_0 = arith.constant 0 : i32
    %c0_i32_1 = arith.constant 0 : i32
    return %c0_i32, %c0_i32_0 : i32, i32
  }
  func.func @transform_4(%arg0: i32) -> (i32, i32) {
    %c0_i32 = arith.constant 0 : i32
    %c0_i32_0 = arith.constant 0 : i32
    return %arg0, %c0_i32 : i32, i32
  }
}

</mosaic_0001>

<llo_original>
// kernel: tpu_custom_call.1
$region0: #{tpu_custom_call.1}
  #allocation0 [shape = 'u32[]', space=smem, size = 0x4, offset = 0x4, fixed_abs, tag = 'smem constant byte address 0x4 - core index']
  #allocation1 [shape = 'u32[144,128]{1,0:T(1,128)}', space=vmem, size = 0x12000, scoped, tag = 'internal scratch']
  %s0 = inlined_call_operand.hbm [shape: f32[8,32], index: 0, kind: input, shape index: {}]
  %s1 = inlined_call_operand.hbm [shape: bf16[33,512], index: 1, kind: input, shape index: {}]
  %s2 = inlined_call_operand.hbm [shape: bf16[513,256], index: 2, kind: input, shape index: {}]
  %s3 = inlined_call_operand.hbm [shape: bf16[257,128], index: 3, kind: input, shape index: {}]
  %s4 = inlined_call_operand.hbm [shape: f32[8,128], index: 4, kind: output, shape index: {}]
  %s5 = sld [smem:[#allocation0]]
  $region42: #{tpu_custom_call.1} parent=0
    _
  %s7 = ssub.s32 1, %s5
  %s8 = scalar_select 0, %s7, %s5
  $region1: #{tpu_custom_call.1} parent=0
    #allocation2 [shape = 'u8[4096]{0}', space=vmem, size = 0x1000, scoped, tag = 'input window, operand 0, single buffered']
    #allocation3 [shape = 's32[1]{0}', space=sflag, size = 0x4, scoped, tag = 'scoped memory for tpu_custom_call.1']
    #allocation4 [shape = 's32[1]{0}', space=sflag, size = 0x4, scoped, tag = 'scoped memory for tpu_custom_call.1']
    #allocation5 [shape = 'u8[40960]{0}', space=vmem, size = 0xa000, scoped, tag = 'input window, operand 1, single buffered']
    #allocation6 [shape = 's32[1]{0}', space=sflag, size = 0x4, scoped, tag = 'scoped memory for tpu_custom_call.1']
    #allocation7 [shape = 'u8[266240]{0}', space=vmem, size = 0x41000, scoped, tag = 'input window, operand 2, single buffered']
    #allocation8 [shape = 'u8[67584]{0}', space=vmem, size = 0x10800, scoped, tag = 'input window, operand 3, single buffered']
    #allocation9 [shape = 's32[1]{0}', space=sflag, size = 0x4, scoped, tag = 'scoped memory for tpu_custom_call.1']
    #allocation10 [shape = 'u8[4096]{0}', space=vmem, size = 0x1000, scoped, tag = 'output window, operand 0, single buffered']
    %9 = vsyncpa [#allocation3], 0
    %10 = vsyncpa [#allocation6], 0
    %11 = vsyncpa [#allocation9], 0
    %12 = vsyncpa [#allocation4], 0
    // Predicated region
    $region2: #{tpu_custom_call.1} parent=1 // pred_check
      _
    $region3: #{tpu_custom_call.1} parent=1 // pred_check_branch
      %14 = sbr.rel (0) target = $region5
    $region4: #{tpu_custom_call.1} parent=1 // pred_region
      %s16 = ssub.s32 128, 128
      %17 = vsyncadd [#allocation3], %s16
      %s19 = sshll.u32 [#allocation2], 4
      %s20 = int_to_ptr.vmem [resolvable:$true] %s19
      %22 = dma.hbm_to_vmem [thread:$0]  %s0, 128, %s20, [#allocation3]
    $region5: #{tpu_custom_call.1} parent=1 // pred_fallthru
      _
    // Predicated region
    $region6: #{tpu_custom_call.1} parent=1 // pred_check
      _
    $region7: #{tpu_custom_call.1} parent=1 // pred_check_branch
      %24 = sbr.rel (0) target = $region9
    $region8: #{tpu_custom_call.1} parent=1 // pred_region
      %s26 = ssub.s32 1280, 1280
      %27 = vsyncadd [#allocation6], %s26
      %s28 = sshll.u32 [#allocation5], 4
      %s29 = int_to_ptr.vmem [resolvable:$true] %s28
      %34 = dma.hbm_to_vmem [thread:$0]  %s1, 1280, %s29, [#allocation6], 256, 256, 16
    $region9: #{tpu_custom_call.1} parent=1 // pred_fallthru
      _
    // Predicated region
    $region10: #{tpu_custom_call.1} parent=1 // pred_check
      _
    $region11: #{tpu_custom_call.1} parent=1 // pred_check_branch
      %36 = sbr.rel (0) target = $region13
    $region12: #{tpu_custom_call.1} parent=1 // pred_region
      %s38 = ssub.s32 8320, 8320
      %39 = vsyncadd [#allocation6], %s38
      %s40 = sshll.u32 [#allocation7], 4
      %s41 = int_to_ptr.vmem [resolvable:$true] %s40
      %46 = dma.hbm_to_vmem [thread:$0]  %s2, 8320, %s41, [#allocation6], 128, 128, 8
    $region13: #{tpu_custom_call.1} parent=1 // pred_fallthru
      _
    // Predicated region
    $region14: #{tpu_custom_call.1} parent=1 // pred_check
      _
    $region15: #{tpu_custom_call.1} parent=1 // pred_check_branch
      %48 = sbr.rel (0) target = $region17
    $region16: #{tpu_custom_call.1} parent=1 // pred_region
      %s50 = ssub.s32 2112, 2112
      %51 = vsyncadd [#allocation9], %s50
      %s52 = sshll.u32 [#allocation8], 4
      %s53 = int_to_ptr.vmem [resolvable:$true] %s52
      %58 = dma.hbm_to_vmem [thread:$0]  %s3, 2112, %s53, [#allocation9], 64, 64, 4
    $region17: #{tpu_custom_call.1} parent=1 // pred_fallthru
      _
    // Predicated region
    $region18: #{tpu_custom_call.1} parent=1 // pred_check
      _
    $region19: #{tpu_custom_call.1} parent=1 // pred_check_branch
      %60 = sbr.rel (0) target = $region21
    $region20: #{tpu_custom_call.1} parent=1 // pred_region
      %61 = dma.done [#allocation3], 128
    $region21: #{tpu_custom_call.1} parent=1 // pred_fallthru
      _
    // Predicated region
    $region22: #{tpu_custom_call.1} parent=1 // pred_check
      _
    $region23: #{tpu_custom_call.1} parent=1 // pred_check_branch
      %63 = sbr.rel (0) target = $region25
    $region24: #{tpu_custom_call.1} parent=1 // pred_region
      %64 = dma.done [#allocation6], 1280
    $region25: #{tpu_custom_call.1} parent=1 // pred_fallthru
      _
    // Predicated region
    $region26: #{tpu_custom_call.1} parent=1 // pred_check
      _
    $region27: #{tpu_custom_call.1} parent=1 // pred_check_branch
      %66 = sbr.rel (0) target = $region29
    $region28: #{tpu_custom_call.1} parent=1 // pred_region
      %67 = dma.done [#allocation6], 8320
    $region29: #{tpu_custom_call.1} parent=1 // pred_fallthru
      _
    // Predicated region
    $region30: #{tpu_custom_call.1} parent=1 // pred_check
      _
    $region31: #{tpu_custom_call.1} parent=1 // pred_check_branch
      %69 = sbr.rel (0) target = $region33
    $region32: #{tpu_custom_call.1} parent=1 // pred_region
      %70 = dma.done [#allocation9], 2112
    $region33: #{tpu_custom_call.1} parent=1 // pred_fallthru
      _
    %v72 = vld [vmem:[#allocation2] sm:$0xff]
    %v73 = vld [vmem:[#allocation5] sm:$0xff]
    %v74 = vld [vmem:[#allocation5 + $0x8] sm:$0xff]
    %v75 = vld [vmem:[#allocation5 + $0x10] sm:$0xff]
    %v76 = vld [vmem:[#allocation5 + $0x18] sm:$0xff]
    %v77 = vld [vmem:[#allocation5 + $0x20] sm:$0xff]
    %v78 = vld [vmem:[#allocation5 + $0x28] sm:$0xff]
    %v79 = vld [vmem:[#allocation5 + $0x30] sm:$0xff]
    %v80 = vld [vmem:[#allocation5 + $0x38] sm:$0xff]
    %v81 = vld [vmem:[#allocation5 + $0x40] sm:$0x11]
    %v82 = vld [vmem:[#allocation5 + $0x48] sm:$0x11]
    %v83 = vunpack.c.l.bf16 %v81
    %v84 = vunpack.c.h.bf16 %v81
    %v85 = vunpack.c.l.bf16 %v82
    %v86 = vunpack.c.h.bf16 %v82
    %v87 = vpack.c.bf16 %v72, %v72
    %v88 = vlaneseq
    %v89 = vshrl.u32 %v88, 7
    %v90 = vsub.s32 0, %v89
    %v91 = vrot.slane %v83, %v90
    %v92 = vlaneseq
    %v93 = vshrl.u32 %v92, 7
    %v94 = vsub.s32 0, %v93
    %v95 = vrot.slane %v84, %v94
    %v96 = vlaneseq
    %v97 = vshrl.u32 %v96, 7
    %v98 = vsub.s32 0, %v97
    %v99 = vrot.slane %v85, %v98
    %v100 = vlaneseq
    %v101 = vshrl.u32 %v100, 7
    %v102 = vsub.s32 0, %v101
    %v103 = vrot.slane %v86, %v102
    %v112 = vunpack.c.l.b16 %v73
    %v113 = vunpack.c.h.b16 %v73
    %v114 = vunpack.c.l.b16 %v74
    %v115 = vunpack.c.h.b16 %v74
    %v116 = vunpack.c.l.b16 %v75
    %v117 = vunpack.c.h.b16 %v75
    %v118 = vunpack.c.l.b16 %v76
    %v119 = vunpack.c.h.b16 %v76
    %v120 = vunpack.c.l.b16 %v77
    %v121 = vunpack.c.h.b16 %v77
    %v122 = vunpack.c.l.b16 %v78
    %v123 = vunpack.c.h.b16 %v78
    %v124 = vunpack.c.l.b16 %v79
    %v125 = vunpack.c.h.b16 %v79
    %v126 = vunpack.c.l.b16 %v80
    %v127 = vunpack.c.h.b16 %v80
    %v128 = vpack.c.b16 %v116, %v112
    %v129 = vpack.c.b16 %v117, %v113
    %v130 = vpack.c.b16 %v118, %v114
    %v131 = vpack.c.b16 %v119, %v115
    %v132 = vpack.c.b16 %v124, %v120
    %v133 = vpack.c.b16 %v125, %v121
    %v134 = vpack.c.b16 %v126, %v122
    %v135 = vpack.c.b16 %v127, %v123
    %vm144 = vcmask 261120
    %v146 = vsel %vm144, %v87, 0
    %148 = vmatprep.subr.bf16.mxu0 0
    %149 = vmatpush1.bf16.msra.mxu0 0
    %150 = vmatprep.subr.bf16.mxu0 0
    %151 = vmatpush1.bf16.msra.mxu0 0
    %152 = vmatprep.subr.bf16.mxu0 0
    %153 = vmatpush1.bf16.msra.mxu0 0
    %154 = vmatprep.subr.bf16.mxu0 0
    %155 = vmatpush1.bf16.msra.mxu0 0
    %156 = vmatprep.subr.bf16.mxu0 0
    %157 = vmatpush1.bf16.msra.mxu0 0
    %158 = vmatprep.subr.bf16.mxu0 0
    %159 = vmatpush1.bf16.msra.mxu0 0
    %160 = vmatprep.subr.bf16.mxu0 %v133
    %161 = vmatpush1.bf16.msra.mxu0 %v132
    %162 = vmatprep.subr.bf16.mxu0 %v129
    %163 = vmatpush1.bf16.msra.mxu0 %v128
    %164 = vmatprep.subr.bf16.mxu0 0
    %165 = vmatpush2.bf16.msra.mxu0 0
    %166 = vmatprep.subr.bf16.mxu0 0
    %167 = vmatpush2.bf16.msra.mxu0 0
    %168 = vmatprep.subr.bf16.mxu0 0
    %169 = vmatpush2.bf16.msra.mxu0 0
    %170 = vmatprep.subr.bf16.mxu0 0
    %171 = vmatpush2.bf16.msra.mxu0 0
    %172 = vmatprep.subr.bf16.mxu0 0
    %173 = vmatpush2.bf16.msra.mxu0 0
    %174 = vmatprep.subr.bf16.mxu0 0
    %175 = vmatpush2.bf16.msra.mxu0 0
    %176 = vmatprep.subr.bf16.mxu0 0
    %177 = vmatpush2.bf16.msra.mxu0 0
    %178 = vmatprep.subr.bf16.mxu0 0
    %179 = vmatpush2.bf16.msra.mxu0 0
    %180 = vmatprep.mubr.bf16.mxu0 0
    %181 = vmatmul.mubr.bf16.gmra.mxu0 %v146
    %v182 = vpop.f32.mrf.mxu0
    %v183 = vadd.f32 %v91, %v182
    %v184 = vpop.f32.mrf.mxu0
    %v185 = vadd.f32 %v95, %v184
    %v186 = vpop.f32.mrf.mxu0
    %v187 = vpop.f32.mrf.mxu0
    %188 = vdwg.mxu0
    %189 = vmatprep.subr.bf16.mxu0 0
    %190 = vmatpush1.bf16.msra.mxu0 0
    %191 = vmatprep.subr.bf16.mxu0 0
    %192 = vmatpush1.bf16.msra.mxu0 0
    %193 = vmatprep.subr.bf16.mxu0 0
    %194 = vmatpush1.bf16.msra.mxu0 0
    %195 = vmatprep.subr.bf16.mxu0 0
    %196 = vmatpush1.bf16.msra.mxu0 0
    %197 = vmatprep.subr.bf16.mxu0 0
    %198 = vmatpush1.bf16.msra.mxu0 0
    %199 = vmatprep.subr.bf16.mxu0 0
    %200 = vmatpush1.bf16.msra.mxu0 0
    %201 = vmatprep.subr.bf16.mxu0 %v135
    %202 = vmatpush1.bf16.msra.mxu0 %v134
    %203 = vmatprep.subr.bf16.mxu0 %v131
    %204 = vmatpush1.bf16.msra.mxu0 %v130
    %205 = vmatprep.subr.bf16.mxu0 0
    %206 = vmatpush2.bf16.msra.mxu0 0
    %207 = vmatprep.subr.bf16.mxu0 0
    %208 = vmatpush2.bf16.msra.mxu0 0
    %209 = vmatprep.subr.bf16.mxu0 0
    %210 = vmatpush2.bf16.msra.mxu0 0
    %211 = vmatprep.subr.bf16.mxu0 0
    %212 = vmatpush2.bf16.msra.mxu0 0
    %213 = vmatprep.subr.bf16.mxu0 0
    %214 = vmatpush2.bf16.msra.mxu0 0
    %215 = vmatprep.subr.bf16.mxu0 0
    %216 = vmatpush2.bf16.msra.mxu0 0
    %217 = vmatprep.subr.bf16.mxu0 0
    %218 = vmatpush2.bf16.msra.mxu0 0
    %219 = vmatprep.subr.bf16.mxu0 0
    %220 = vmatpush2.bf16.msra.mxu0 0
    %221 = vmatprep.mubr.bf16.mxu0 0
    %222 = vmatmul.mubr.bf16.gmra.mxu0 %v146
    %v223 = vpop.f32.mrf.mxu0
    %v224 = vadd.f32 %v99, %v223
    %v225 = vpop.f32.mrf.mxu0
    %v226 = vadd.f32 %v103, %v225
    %v227 = vpop.f32.mrf.mxu0
    %v228 = vpop.f32.mrf.mxu0
    %229 = vdwg.mxu0
    %v230 = vmax.f32 %v183, 0.0
    %v231 = vmax.f32 %v185, 0.0
    %v232 = vmax.f32 %v224, 0.0
    %v233 = vmax.f32 %v226, 0.0
    %v234 = vld [vmem:[#allocation7] sm:$0xff]
    %v235 = vld [vmem:[#allocation7 + $0x8] sm:$0xff]
    %v236 = vld [vmem:[#allocation7 + $0x10] sm:$0xff]
    %v237 = vld [vmem:[#allocation7 + $0x18] sm:$0xff]
    %v238 = vld [vmem:[#allocation7 + $0x20] sm:$0xff]
    %v239 = vld [vmem:[#allocation7 + $0x28] sm:$0xff]
    %v240 = vld [vmem:[#allocation7 + $0x30] sm:$0xff]
    %v241 = vld [vmem:[#allocation7 + $0x38] sm:$0xff]
    %v242 = vld [vmem:[#allocation7 + $0x40] sm:$0xff]
    %v243 = vld [vmem:[#allocation7 + $0x48] sm:$0xff]
    %v244 = vld [vmem:[#allocation7 + $0x50] sm:$0xff]
    %v245 = vld [vmem:[#allocation7 + $0x58] sm:$0xff]
    %v246 = vld [vmem:[#allocation7 + $0x60] sm:$0xff]
    %v247 = vld [vmem:[#allocation7 + $0x68] sm:$0xff]
    %v248 = vld [vmem:[#allocation7 + $0x70] sm:$0xff]
    %v249 = vld [vmem:[#allocation7 + $0x78] sm:$0xff]
    %v250 = vld [vmem:[#allocation7 + $0x80] sm:$0xff]
    %v251 = vld [vmem:[#allocation7 + $0x88] sm:$0xff]
    %v252 = vld [vmem:[#allocation7 + $0x90] sm:$0xff]
    %v253 = vld [vmem:[#allocation7 + $0x98] sm:$0xff]
    %v254 = vld [vmem:[#allocation7 + $0xa0] sm:$0xff]
    %v255 = vld [vmem:[#allocation7 + $0xa8] sm:$0xff]
    %v256 = vld [vmem:[#allocation7 + $0xb0] sm:$0xff]
    %v257 = vld [vmem:[#allocation7 + $0xb8] sm:$0xff]
    %v258 = vld [vmem:[#allocation7 + $0xc0] sm:$0xff]
    %v259 = vld [vmem:[#allocation7 + $0xc8] sm:$0xff]
    %v260 = vld [vmem:[#allocation7 + $0xd0] sm:$0xff]
    %v261 = vld [vmem:[#allocation7 + $0xd8] sm:$0xff]
    %v262 = vld [vmem:[#allocation7 + $0xe0] sm:$0xff]
    %v263 = vld [vmem:[#allocation7 + $0xe8] sm:$0xff]
    %v264 = vld [vmem:[#allocation7 + $0xf0] sm:$0xff]
    %v265 = vld [vmem:[#allocation7 + $0xf8] sm:$0xff]
    %v266 = vld [vmem:[#allocation7 + $0x100] sm:$0xff]
    %v267 = vld [vmem:[#allocation7 + $0x108] sm:$0xff]
    %v268 = vld [vmem:[#allocation7 + $0x110] sm:$0xff]
    %v269 = vld [vmem:[#allocation7 + $0x118] sm:$0xff]
    %v270 = vld [vmem:[#allocation7 + $0x120] sm:$0xff]
    %v271 = vld [vmem:[#allocation7 + $0x128] sm:$0xff]
    %v272 = vld [vmem:[#allocation7 + $0x130] sm:$0xff]
    %v273 = vld [vmem:[#allocation7 + $0x138] sm:$0xff]
    %v274 = vld [vmem:[#allocation7 + $0x140] sm:$0xff]
    %v275 = vld [vmem:[#allocation7 + $0x148] sm:$0xff]
    %v276 = vld [vmem:[#allocation7 + $0x150] sm:$0xff]
    %v277 = vld [vmem:[#allocation7 + $0x158] sm:$0xff]
    %v278 = vld [vmem:[#allocation7 + $0x160] sm:$0xff]
    %v279 = vld [vmem:[#allocation7 + $0x168] sm:$0xff]
    %v280 = vld [vmem:[#allocation7 + $0x170] sm:$0xff]
    %v281 = vld [vmem:[#allocation7 + $0x178] sm:$0xff]
    %v282 = vld [vmem:[#allocation7 + $0x180] sm:$0xff]
    %v283 = vld [vmem:[#allocation7 + $0x188] sm:$0xff]
    %v284 = vld [vmem:[#allocation7 + $0x190] sm:$0xff]
    %v285 = vld [vmem:[#allocation7 + $0x198] sm:$0xff]
    %v286 = vld [vmem:[#allocation7 + $0x1a0] sm:$0xff]
    %v287 = vld [vmem:[#allocation7 + $0x1a8] sm:$0xff]
    %v288 = vld [vmem:[#allocation7 + $0x1b0] sm:$0xff]
    %v289 = vld [vmem:[#allocation7 + $0x1b8] sm:$0xff]
    %v290 = vld [vmem:[#allocation7 + $0x1c0] sm:$0xff]
    %v291 = vld [vmem:[#allocation7 + $0x1c8] sm:$0xff]
    %v292 = vld [vmem:[#allocation7 + $0x1d0] sm:$0xff]
    %v293 = vld [vmem:[#allocation7 + $0x1d8] sm:$0xff]
    %v294 = vld [vmem:[#allocation7 + $0x1e0] sm:$0xff]
    %v295 = vld [vmem:[#allocation7 + $0x1e8] sm:$0xff]
    %v296 = vld [vmem:[#allocation7 + $0x1f0] sm:$0xff]
    %v297 = vld [vmem:[#allocation7 + $0x1f8] sm:$0xff]
    %v298 = vld [vmem:[#allocation7 + $0x200] sm:$0x11]
    %v299 = vunpack.c.l.bf16 %v298
    %v300 = vunpack.c.h.bf16 %v298
    %v301 = vpack.c.bf16 %v230, %v230
    %v302 = vpack.c.bf16 %v231, %v231
    %v303 = vpack.c.bf16 %v232, %v232
    %v304 = vpack.c.bf16 %v233, %v233
    %v305 = vlaneseq
    %v306 = vshrl.u32 %v305, 7
    %v307 = vsub.s32 0, %v306
    %v308 = vrot.slane %v299, %v307
    %v309 = vlaneseq
    %v310 = vshrl.u32 %v309, 7
    %v311 = vsub.s32 0, %v310
    %v312 = vrot.slane %v300, %v311
    %v377 = vunpack.c.l.b16 %v234
    %v378 = vunpack.c.h.b16 %v234
    %v379 = vunpack.c.l.b16 %v235
    %v380 = vunpack.c.h.b16 %v235
    %v381 = vunpack.c.l.b16 %v236
    %v382 = vunpack.c.h.b16 %v236
    %v383 = vunpack.c.l.b16 %v237
    %v384 = vunpack.c.h.b16 %v237
    %v385 = vunpack.c.l.b16 %v238
    %v386 = vunpack.c.h.b16 %v238
    %v387 = vunpack.c.l.b16 %v239
    %v388 = vunpack.c.h.b16 %v239
    %v389 = vunpack.c.l.b16 %v240
    %v390 = vunpack.c.h.b16 %v240
    %v391 = vunpack.c.l.b16 %v241
    %v392 = vunpack.c.h.b16 %v241
    %v393 = vunpack.c.l.b16 %v242
    %v394 = vunpack.c.h.b16 %v242
    %v395 = vunpack.c.l.b16 %v243
    %v396 = vunpack.c.h.b16 %v243
    %v397 = vunpack.c.l.b16 %v244
    %v398 = vunpack.c.h.b16 %v244
    %v399 = vunpack.c.l.b16 %v245
    %v400 = vunpack.c.h.b16 %v245
    %v401 = vunpack.c.l.b16 %v246
    %v402 = vunpack.c.h.b16 %v246
    %v403 = vunpack.c.l.b16 %v247
    %v404 = vunpack.c.h.b16 %v247
    %v405 = vunpack.c.l.b16 %v248
    %v406 = vunpack.c.h.b16 %v248
    %v407 = vunpack.c.l.b16 %v249
    %v408 = vunpack.c.h.b16 %v249
    %v409 = vunpack.c.l.b16 %v250
    %v410 = vunpack.c.h.b16 %v250
    %v411 = vunpack.c.l.b16 %v251
    %v412 = vunpack.c.h.b16 %v251
    %v413 = vunpack.c.l.b16 %v252
    %v414 = vunpack.c.h.b16 %v252
    %v415 = vunpack.c.l.b16 %v253
    %v416 = vunpack.c.h.b16 %v253
    %v417 = vunpack.c.l.b16 %v254
    %v418 = vunpack.c.h.b16 %v254
    %v419 = vunpack.c.l.b16 %v255
    %v420 = vunpack.c.h.b16 %v255
    %v421 = vunpack.c.l.b16 %v256
    %v422 = vunpack.c.h.b16 %v256
    %v423 = vunpack.c.l.b16 %v257
    %v424 = vunpack.c.h.b16 %v257
    %v425 = vunpack.c.l.b16 %v258
    %v426 = vunpack.c.h.b16 %v258
    %v427 = vunpack.c.l.b16 %v259
    %v428 = vunpack.c.h.b16 %v259
    %v429 = vunpack.c.l.b16 %v260
    %v430 = vunpack.c.h.b16 %v260
    %v431 = vunpack.c.l.b16 %v261
    %v432 = vunpack.c.h.b16 %v261
    %v433 = vunpack.c.l.b16 %v262
    %v434 = vunpack.c.h.b16 %v262
    %v435 = vunpack.c.l.b16 %v263
    %v436 = vunpack.c.h.b16 %v263
    %v437 = vunpack.c.l.b16 %v264
    %v438 = vunpack.c.h.b16 %v264
    %v439 = vunpack.c.l.b16 %v265
    %v440 = vunpack.c.h.b16 %v265
    %v441 = vunpack.c.l.b16 %v266
    %v442 = vunpack.c.h.b16 %v266
    %v443 = vunpack.c.l.b16 %v267
    %v444 = vunpack.c.h.b16 %v267
    %v445 = vunpack.c.l.b16 %v268
    %v446 = vunpack.c.h.b16 %v268
    %v447 = vunpack.c.l.b16 %v269
    %v448 = vunpack.c.h.b16 %v269
    %v449 = vunpack.c.l.b16 %v270
    %v450 = vunpack.c.h.b16 %v270
    %v451 = vunpack.c.l.b16 %v271
    %v452 = vunpack.c.h.b16 %v271
    %v453 = vunpack.c.l.b16 %v272
    %v454 = vunpack.c.h.b16 %v272
    %v455 = vunpack.c.l.b16 %v273
    %v456 = vunpack.c.h.b16 %v273
    %v457 = vunpack.c.l.b16 %v274
    %v458 = vunpack.c.h.b16 %v274
    %v459 = vunpack.c.l.b16 %v275
    %v460 = vunpack.c.h.b16 %v275
    %v461 = vunpack.c.l.b16 %v276
    %v462 = vunpack.c.h.b16 %v276
    %v463 = vunpack.c.l.b16 %v277
    %v464 = vunpack.c.h.b16 %v277
    %v465 = vunpack.c.l.b16 %v278
    %v466 = vunpack.c.h.b16 %v278
    %v467 = vunpack.c.l.b16 %v279
    %v468 = vunpack.c.h.b16 %v279
    %v469 = vunpack.c.l.b16 %v280
    %v470 = vunpack.c.h.b16 %v280
    %v471 = vunpack.c.l.b16 %v281
    %v472 = vunpack.c.h.b16 %v281
    %v473 = vunpack.c.l.b16 %v282
    %v474 = vunpack.c.h.b16 %v282
    %v475 = vunpack.c.l.b16 %v283
    %v476 = vunpack.c.h.b16 %v283
    %v477 = vunpack.c.l.b16 %v284
    %v478 = vunpack.c.h.b16 %v284
    %v479 = vunpack.c.l.b16 %v285
    %v480 = vunpack.c.h.b16 %v285
    %v481 = vunpack.c.l.b16 %v286
    %v482 = vunpack.c.h.b16 %v286
    %v483 = vunpack.c.l.b16 %v287
    %v484 = vunpack.c.h.b16 %v287
    %v485 = vunpack.c.l.b16 %v288
    %v486 = vunpack.c.h.b16 %v288
    %v487 = vunpack.c.l.b16 %v289
    %v488 = vunpack.c.h.b16 %v289
    %v489 = vunpack.c.l.b16 %v290
    %v490 = vunpack.c.h.b16 %v290
    %v491 = vunpack.c.l.b16 %v291
    %v492 = vunpack.c.h.b16 %v291
    %v493 = vunpack.c.l.b16 %v292
    %v494 = vunpack.c.h.b16 %v292
    %v495 = vunpack.c.l.b16 %v293
    %v496 = vunpack.c.h.b16 %v293
    %v497 = vunpack.c.l.b16 %v294
    %v498 = vunpack.c.h.b16 %v294
    %v499 = vunpack.c.l.b16 %v295
    %v500 = vunpack.c.h.b16 %v295
    %v501 = vunpack.c.l.b16 %v296
    %v502 = vunpack.c.h.b16 %v296
    %v503 = vunpack.c.l.b16 %v297
    %v504 = vunpack.c.h.b16 %v297
    %v505 = vpack.c.b16 %v379, %v377
    %v506 = vpack.c.b16 %v380, %v378
    %v507 = vpack.c.b16 %v383, %v381
    %v508 = vpack.c.b16 %v384, %v382
    %v509 = vpack.c.b16 %v387, %v385
    %v510 = vpack.c.b16 %v388, %v386
    %v511 = vpack.c.b16 %v391, %v389
    %v512 = vpack.c.b16 %v392, %v390
    %v513 = vpack.c.b16 %v395, %v393
    %v514 = vpack.c.b16 %v396, %v394
    %v515 = vpack.c.b16 %v399, %v397
    %v516 = vpack.c.b16 %v400, %v398
    %v517 = vpack.c.b16 %v403, %v401
    %v518 = vpack.c.b16 %v404, %v402
    %v519 = vpack.c.b16 %v407, %v405
    %v520 = vpack.c.b16 %v408, %v406
    %v521 = vpack.c.b16 %v411, %v409
    %v522 = vpack.c.b16 %v412, %v410
    %v523 = vpack.c.b16 %v415, %v413
    %v524 = vpack.c.b16 %v416, %v414
    %v525 = vpack.c.b16 %v419, %v417
    %v526 = vpack.c.b16 %v420, %v418
    %v527 = vpack.c.b16 %v423, %v421
    %v528 = vpack.c.b16 %v424, %v422
    %v529 = vpack.c.b16 %v427, %v425
    %v530 = vpack.c.b16 %v428, %v426
    %v531 = vpack.c.b16 %v431, %v429
    %v532 = vpack.c.b16 %v432, %v430
    %v533 = vpack.c.b16 %v435, %v433
    %v534 = vpack.c.b16 %v436, %v434
    %v535 = vpack.c.b16 %v439, %v437
    %v536 = vpack.c.b16 %v440, %v438
    %v537 = vpack.c.b16 %v443, %v441
    %v538 = vpack.c.b16 %v444, %v442
    %v539 = vpack.c.b16 %v447, %v445
    %v540 = vpack.c.b16 %v448, %v446
    %v541 = vpack.c.b16 %v451, %v449
    %v542 = vpack.c.b16 %v452, %v450
    %v543 = vpack.c.b16 %v455, %v453
    %v544 = vpack.c.b16 %v456, %v454
    %v545 = vpack.c.b16 %v459, %v457
    %v546 = vpack.c.b16 %v460, %v458
    %v547 = vpack.c.b16 %v463, %v461
    %v548 = vpack.c.b16 %v464, %v462
    %v549 = vpack.c.b16 %v467, %v465
    %v550 = vpack.c.b16 %v468, %v466
    %v551 = vpack.c.b16 %v471, %v469
    %v552 = vpack.c.b16 %v472, %v470
    %v553 = vpack.c.b16 %v475, %v473
    %v554 = vpack.c.b16 %v476, %v474
    %v555 = vpack.c.b16 %v479, %v477
    %v556 = vpack.c.b16 %v480, %v478
    %v557 = vpack.c.b16 %v483, %v481
    %v558 = vpack.c.b16 %v484, %v482
    %v559 = vpack.c.b16 %v487, %v485
    %v560 = vpack.c.b16 %v488, %v486
    %v561 = vpack.c.b16 %v491, %v489
    %v562 = vpack.c.b16 %v492, %v490
    %v563 = vpack.c.b16 %v495, %v493
    %v564 = vpack.c.b16 %v496, %v494
    %v565 = vpack.c.b16 %v499, %v497
    %v566 = vpack.c.b16 %v500, %v498
    %v567 = vpack.c.b16 %v503, %v501
    %v568 = vpack.c.b16 %v504, %v502
    %633 = vmatprep.subr.bf16.mxu0 %v520
    %634 = vmatpush1.bf16.msra.mxu0 %v519
    %635 = vmatprep.subr.bf16.mxu0 %v518
    %636 = vmatpush1.bf16.msra.mxu0 %v517
    %637 = vmatprep.subr.bf16.mxu0 %v516
    %638 = vmatpush1.bf16.msra.mxu0 %v515
    %639 = vmatprep.subr.bf16.mxu0 %v514
    %640 = vmatpush1.bf16.msra.mxu0 %v513
    %641 = vmatprep.subr.bf16.mxu0 %v512
    %642 = vmatpush1.bf16.msra.mxu0 %v511
    %643 = vmatprep.subr.bf16.mxu0 %v510
    %644 = vmatpush1.bf16.msra.mxu0 %v509
    %645 = vmatprep.subr.bf16.mxu0 %v508
    %646 = vmatpush1.bf16.msra.mxu0 %v507
    %647 = vmatprep.subr.bf16.mxu0 %v506
    %648 = vmatpush1.bf16.msra.mxu0 %v505
    %649 = vmatprep.subr.bf16.mxu0 %v536
    %650 = vmatpush2.bf16.msra.mxu0 %v535
    %651 = vmatprep.subr.bf16.mxu0 %v534
    %652 = vmatpush2.bf16.msra.mxu0 %v533
    %653 = vmatprep.subr.bf16.mxu0 %v532
    %654 = vmatpush2.bf16.msra.mxu0 %v531
    %655 = vmatprep.subr.bf16.mxu0 %v530
    %656 = vmatpush2.bf16.msra.mxu0 %v529
    %657 = vmatprep.subr.bf16.mxu0 %v528
    %658 = vmatpush2.bf16.msra.mxu0 %v527
    %659 = vmatprep.subr.bf16.mxu0 %v526
    %660 = vmatpush2.bf16.msra.mxu0 %v525
    %661 = vmatprep.subr.bf16.mxu0 %v524
    %662 = vmatpush2.bf16.msra.mxu0 %v523
    %663 = vmatprep.subr.bf16.mxu0 %v522
    %664 = vmatpush2.bf16.msra.mxu0 %v521
    %665 = vmatprep.mubr.bf16.mxu0 %v302
    %666 = vmatmul.mubr.bf16.gmra.mxu0 %v301
    %v667 = vpop.f32.mrf.mxu0
    %v668 = vadd.f32 %v308, %v667
    %v669 = vpop.f32.mrf.mxu0
    %v670 = vadd.f32 %v312, %v669
    %v671 = vpop.f32.mrf.mxu0
    %v672 = vpop.f32.mrf.mxu0
    %673 = vdwg.mxu0
    %674 = vmatprep.subr.bf16.mxu0 %v552
    %675 = vmatpush1.bf16.msra.mxu0 %v551
    %676 = vmatprep.subr.bf16.mxu0 %v550
    %677 = vmatpush1.bf16.msra.mxu0 %v549
    %678 = vmatprep.subr.bf16.mxu0 %v548
    %679 = vmatpush1.bf16.msra.mxu0 %v547
    %680 = vmatprep.subr.bf16.mxu0 %v546
    %681 = vmatpush1.bf16.msra.mxu0 %v545
    %682 = vmatprep.subr.bf16.mxu0 %v544
    %683 = vmatpush1.bf16.msra.mxu0 %v543
    %684 = vmatprep.subr.bf16.mxu0 %v542
    %685 = vmatpush1.bf16.msra.mxu0 %v541
    %686 = vmatprep.subr.bf16.mxu0 %v540
    %687 = vmatpush1.bf16.msra.mxu0 %v539
    %688 = vmatprep.subr.bf16.mxu0 %v538
    %689 = vmatpush1.bf16.msra.mxu0 %v537
    %690 = vmatprep.subr.bf16.mxu0 %v568
    %691 = vmatpush2.bf16.msra.mxu0 %v567
    %692 = vmatprep.subr.bf16.mxu0 %v566
    %693 = vmatpush2.bf16.msra.mxu0 %v565
    %694 = vmatprep.subr.bf16.mxu0 %v564
    %695 = vmatpush2.bf16.msra.mxu0 %v563
    %696 = vmatprep.subr.bf16.mxu0 %v562
    %697 = vmatpush2.bf16.msra.mxu0 %v561
    %698 = vmatprep.subr.bf16.mxu0 %v560
    %699 = vmatpush2.bf16.msra.mxu0 %v559
    %700 = vmatprep.subr.bf16.mxu0 %v558
    %701 = vmatpush2.bf16.msra.mxu0 %v557
    %702 = vmatprep.subr.bf16.mxu0 %v556
    %703 = vmatpush2.bf16.msra.mxu0 %v555
    %704 = vmatprep.subr.bf16.mxu0 %v554
    %705 = vmatpush2.bf16.msra.mxu0 %v553
    %706 = vmatprep.mubr.bf16.mxu0 %v304
    %707 = vmatmul.mubr.bf16.gmra.mxu0 %v303
    %v708 = vpop.f32.mrf.mxu0
    %v709 = vadd.f32 %v668, %v708
    %v710 = vpop.f32.mrf.mxu0
    %v711 = vadd.f32 %v670, %v710
    %v712 = vpop.f32.mrf.mxu0
    %v713 = vpop.f32.mrf.mxu0
    %714 = vdwg.mxu0
    %v715 = vmax.f32 %v709, 0.0
    %v716 = vmax.f32 %v711, 0.0
    %v717 = vld [vmem:[#allocation8] sm:$0xf]
    %v718 = vld [vmem:[#allocation8 + $0x4] sm:$0xf]
    %v719 = vld [vmem:[#allocation8 + $0x8] sm:$0xf]
    %v720 = vld [vmem:[#allocation8 + $0xc] sm:$0xf]
    %v721 = vld [vmem:[#allocation8 + $0x10] sm:$0xf]
    %v722 = vld [vmem:[#allocation8 + $0x14] sm:$0xf]
    %v723 = vld [vmem:[#allocation8 + $0x18] sm:$0xf]
    %v724 = vld [vmem:[#allocation8 + $0x1c] sm:$0xf]
    %v725 = vld [vmem:[#allocation8 + $0x20] sm:$0xf]
    %v726 = vld [vmem:[#allocation8 + $0x24] sm:$0xf]
    %v727 = vld [vmem:[#allocation8 + $0x28] sm:$0xf]
    %v728 = vld [vmem:[#allocation8 + $0x2c] sm:$0xf]
    %v729 = vld [vmem:[#allocation8 + $0x30] sm:$0xf]
    %v730 = vld [vmem:[#allocation8 + $0x34] sm:$0xf]
    %v731 = vld [vmem:[#allocation8 + $0x38] sm:$0xf]
    %v732 = vld [vmem:[#allocation8 + $0x3c] sm:$0xf]
    %v733 = vld [vmem:[#allocation8 + $0x40] sm:$0xf]
    %v734 = vld [vmem:[#allocation8 + $0x44] sm:$0xf]
    %v735 = vld [vmem:[#allocation8 + $0x48] sm:$0xf]
    %v736 = vld [vmem:[#allocation8 + $0x4c] sm:$0xf]
    %v737 = vld [vmem:[#allocation8 + $0x50] sm:$0xf]
    %v738 = vld [vmem:[#allocation8 + $0x54] sm:$0xf]
    %v739 = vld [vmem:[#allocation8 + $0x58] sm:$0xf]
    %v740 = vld [vmem:[#allocation8 + $0x5c] sm:$0xf]
    %v741 = vld [vmem:[#allocation8 + $0x60] sm:$0xf]
    %v742 = vld [vmem:[#allocation8 + $0x64] sm:$0xf]
    %v743 = vld [vmem:[#allocation8 + $0x68] sm:$0xf]
    %v744 = vld [vmem:[#allocation8 + $0x6c] sm:$0xf]
    %v745 = vld [vmem:[#allocation8 + $0x70] sm:$0xf]
    %v746 = vld [vmem:[#allocation8 + $0x74] sm:$0xf]
    %v747 = vld [vmem:[#allocation8 + $0x78] sm:$0xf]
    %v748 = vld [vmem:[#allocation8 + $0x7c] sm:$0xf]
    %v749 = vld [vmem:[#allocation8 + $0x80] sm:$0x1]
    %v750 = vunpack.c.l.bf16 %v749
    %v751 = vpack.c.bf16 %v715, %v715
    %v752 = vpack.c.bf16 %v716, %v716
    %v753 = vlaneseq
    %v754 = vshrl.u32 %v753, 7
    %v755 = vsub.s32 0, %v754
    %v756 = vrot.slane %v750, %v755
    %v789 = vunpack.c.l.b16 %v717
    %v790 = vunpack.c.l.b16 %v718
    %v791 = vunpack.c.l.b16 %v719
    %v792 = vunpack.c.l.b16 %v720
    %v793 = vunpack.c.l.b16 %v721
    %v794 = vunpack.c.l.b16 %v722
    %v795 = vunpack.c.l.b16 %v723
    %v796 = vunpack.c.l.b16 %v724
    %v797 = vunpack.c.l.b16 %v725
    %v798 = vunpack.c.l.b16 %v726
    %v799 = vunpack.c.l.b16 %v727
    %v800 = vunpack.c.l.b16 %v728
    %v801 = vunpack.c.l.b16 %v729
    %v802 = vunpack.c.l.b16 %v730
    %v803 = vunpack.c.l.b16 %v731
    %v804 = vunpack.c.l.b16 %v732
    %v805 = vunpack.c.l.b16 %v733
    %v806 = vunpack.c.l.b16 %v734
    %v807 = vunpack.c.l.b16 %v735
    %v808 = vunpack.c.l.b16 %v736
    %v809 = vunpack.c.l.b16 %v737
    %v810 = vunpack.c.l.b16 %v738
    %v811 = vunpack.c.l.b16 %v739
    %v812 = vunpack.c.l.b16 %v740
    %v813 = vunpack.c.l.b16 %v741
    %v814 = vunpack.c.l.b16 %v742
    %v815 = vunpack.c.l.b16 %v743
    %v816 = vunpack.c.l.b16 %v744
    %v817 = vunpack.c.l.b16 %v745
    %v818 = vunpack.c.l.b16 %v746
    %v819 = vunpack.c.l.b16 %v747
    %v820 = vunpack.c.l.b16 %v748
    %v821 = vpack.c.b16 %v790, %v789
    %v822 = vpack.c.b16 %v792, %v791
    %v823 = vpack.c.b16 %v794, %v793
    %v824 = vpack.c.b16 %v796, %v795
    %v825 = vpack.c.b16 %v798, %v797
    %v826 = vpack.c.b16 %v800, %v799
    %v827 = vpack.c.b16 %v802, %v801
    %v828 = vpack.c.b16 %v804, %v803
    %v829 = vpack.c.b16 %v806, %v805
    %v830 = vpack.c.b16 %v808, %v807
    %v831 = vpack.c.b16 %v810, %v809
    %v832 = vpack.c.b16 %v812, %v811
    %v833 = vpack.c.b16 %v814, %v813
    %v834 = vpack.c.b16 %v816, %v815
    %v835 = vpack.c.b16 %v818, %v817
    %v836 = vpack.c.b16 %v820, %v819
    %853 = vmatprep.subr.bf16.mxu0 0
    %854 = vmatpush1.bf16.msra.mxu0 %v828
    %855 = vmatprep.subr.bf16.mxu0 0
    %856 = vmatpush1.bf16.msra.mxu0 %v827
    %857 = vmatprep.subr.bf16.mxu0 0
    %858 = vmatpush1.bf16.msra.mxu0 %v826
    %859 = vmatprep.subr.bf16.mxu0 0
    %860 = vmatpush1.bf16.msra.mxu0 %v825
    %861 = vmatprep.subr.bf16.mxu0 0
    %862 = vmatpush1.bf16.msra.mxu0 %v824
    %863 = vmatprep.subr.bf16.mxu0 0
    %864 = vmatpush1.bf16.msra.mxu0 %v823
    %865 = vmatprep.subr.bf16.mxu0 0
    %866 = vmatpush1.bf16.msra.mxu0 %v822
    %867 = vmatprep.subr.bf16.mxu0 0
    %868 = vmatpush1.bf16.msra.mxu0 %v821
    %869 = vmatprep.subr.bf16.mxu0 0
    %870 = vmatpush2.bf16.msra.mxu0 %v836
    %871 = vmatprep.subr.bf16.mxu0 0
    %872 = vmatpush2.bf16.msra.mxu0 %v835
    %873 = vmatprep.subr.bf16.mxu0 0
    %874 = vmatpush2.bf16.msra.mxu0 %v834
    %875 = vmatprep.subr.bf16.mxu0 0
    %876 = vmatpush2.bf16.msra.mxu0 %v833
    %877 = vmatprep.subr.bf16.mxu0 0
    %878 = vmatpush2.bf16.msra.mxu0 %v832
    %879 = vmatprep.subr.bf16.mxu0 0
    %880 = vmatpush2.bf16.msra.mxu0 %v831
    %881 = vmatprep.subr.bf16.mxu0 0
    %882 = vmatpush2.bf16.msra.mxu0 %v830
    %883 = vmatprep.subr.bf16.mxu0 0
    %884 = vmatpush2.bf16.msra.mxu0 %v829
    %885 = vmatprep.mubr.bf16.mxu0 %v752
    %886 = vmatmul.mubr.bf16.gmra.mxu0 %v751
    %v887 = vpop.f32.mrf.mxu0
    %v888 = vadd.f32 %v756, %v887
    %v889 = vpop.f32.mrf.mxu0
    %v890 = vpop.f32.mrf.mxu0
    %v891 = vpop.f32.mrf.mxu0
    %892 = vdwg.mxu0
    %v893 = vlaneseq
    %v894 = vand.u32 %v893, 127
    %vm895 = vcmp.lt.s32.totalorder %v894, 8
    %v896 = vsel %vm895, %v888, -inf
    %897 = vmax.xlane.f32.xlu0 %v896
    %v898 = vpop.xlane.xlu0 %897
    %v899 = vsub.f32 %v896, %v898
    %v900 = vmul.f32 %v899, 1.442695
    %v901 = vpow.pop %v900
    %v902 = vsel %vm895, %v901, 0.0
    %903 = vadd.xlane.f32.xlu0 %v902
    %v904 = vpop.xlane.xlu0 %903
    %v905 = vrcp.pop %v904
    %v906 = vmul.f32 %v902, %v905
    %vm907 = vcmp.eq.s32.totalorder %v894, 8
    %v908 = vsel %vm907, %v888, %v906
    %909 = vst [vmem:[#allocation10] sm:$0xff] %v908
    // Predicated region
    $region34: #{tpu_custom_call.1} parent=1 // pred_check
      _
    $region35: #{tpu_custom_call.1} parent=1 // pred_check_branch
      %911 = sbr.rel (0) target = $region37
    $region36: #{tpu_custom_call.1} parent=1 // pred_region
      %s913 = ssub.s32 128, 128
      %914 = vsyncadd [#allocation4], %s913
      %s916 = sshll.u32 [#allocation10], 4
      %s917 = int_to_ptr.vmem [resolvable:$true] %s916
      %919 = dma.vmem_to_hbm [thread:$0]  %s917, 128, %s4, [#allocation4]
    $region37: #{tpu_custom_call.1} parent=1 // pred_fallthru
      _
    // Predicated region
    $region38: #{tpu_custom_call.1} parent=1 // pred_check
      _
    $region39: #{tpu_custom_call.1} parent=1 // pred_check_branch
      %921 = sbr.rel (0) target = $region41
    $region40: #{tpu_custom_call.1} parent=1 // pred_region
      %922 = dma.done [#allocation4], 128
    $region41: #{tpu_custom_call.1} parent=1 // pred_fallthru
      _
    %923 = vsyncpa [#allocation3], 1
    %924 = vsyncpa [#allocation6], 1
    %925 = vsyncpa [#allocation9], 1
    %926 = vsyncpa [#allocation4], 1

</llo_original>
